<compile_context>
chip_gen: v5e
topology: v5e:2x2
jax: 0.10.0
libtpu: 0.0.40
codegen_flags: <defaults>
</compile_context>

<pallas_src>
import jax
import jax.numpy as jnp
from jax.experimental import pallas as pl
from jax.experimental.pallas import tpu as pltpu


PACK = 16            # 16 groups of 8 features -> 128 lanes (lane-dense)
MAX_TILE_ROWS = 2048 # packed rows per grid step: 2048*128*4B = 1 MiB/buffer
MIN_GRID_STEPS = 2   # keep >= 2 grid steps so v7x megacore can split the row axis


def _round_up(a, b):
    return ((a + b - 1) // b) * b


def _linear_clamp_kernel(x_ref, w_ref, b_ref, o_ref):
    # x_ref: (T, 128)  w_ref: (128, 128)  b_ref: (1, 128)  o_ref: (T, 128)
    y = jnp.dot(x_ref[...], w_ref[...],
                preferred_element_type=jnp.float32,
                precision=jax.lax.Precision.HIGHEST)
    y = y + b_ref[...]                 # broadcast bias over rows
    y = jnp.clip(y, -12.0, 12.0)       # clamp_min(-12) then clamp_max(12)
    o_ref[...] = y.astype(o_ref.dtype)


def pack_params(weight, bias):
    """Build the 128x128 block-diagonal weight and (1,128) tiled bias ONCE."""
    out_features = weight.shape[0]
    w_big = jnp.kron(jnp.eye(PACK, dtype=weight.dtype), weight.T)    # (128,128)
    b_big = jnp.tile(bias, PACK).reshape(1, PACK * out_features)     # (1,128)
    return w_big, b_big


@jax.jit
def linear_clamp(x, w_big, b_big):
    """x: (..., 8) float32; w_big/b_big from pack_params(weight, bias)."""
    orig_shape = x.shape
    in_features = orig_shape[-1]
    lane_n = w_big.shape[1]                    # 128
    out_features = lane_n // PACK              # 8
    assert in_features * PACK == lane_n

    x2d = x.reshape(-1, in_features)           # (M, 8)
    M = x2d.shape[0]

    # --- pad only to a multiple of PACK (<= 15 rows; none when M%16 == 0) ---
    mp = pl.cdiv(M, PACK)                      # packed rows
    m_pack = mp * PACK
    if m_pack != M:
        x2d = jnp.pad(x2d, ((0, m_pack - M), (0, 0)))
    x_packed = x2d.reshape(mp, lane_n)         # (mp, 128), pure row-major reshape

    # --- tile selection: big tiles, sublane-aligned, keep grid >= 2 steps ---
    tile = min(MAX_TILE_ROWS,
               max(8, _round_up(pl.cdiv(mp, MIN_GRID_STEPS), 8)))
    grid = (pl.cdiv(mp, tile),)                # ragged last block masked by Pallas

    cost = pl.CostEstimate(
        flops=2 * M * in_features * out_features,          # useful FLOPs only
        transcendentals=0,
        bytes_accessed=4 * (2 * mp * lane_n + lane_n * lane_n + lane_n),
    )

    out_packed = pl.pallas_call(
        _linear_clamp_kernel,
        out_shape=jax.ShapeDtypeStruct((mp, lane_n), x.dtype),
        grid_spec=pl.GridSpec(
            grid=grid,
            in_specs=[
                pl.BlockSpec((tile, lane_n), lambda i: (i, 0)),    # x row tiles
                pl.BlockSpec((lane_n, lane_n), lambda i: (0, 0)),  # weight, resident
                pl.BlockSpec((1, lane_n), lambda i: (0, 0)),       # bias, resident
            ],
            out_specs=pl.BlockSpec((tile, lane_n), lambda i: (i, 0)),
        ),
        compiler_params=pltpu.CompilerParams(
            dimension_semantics=("parallel",),   # shard row tiles across v7x TCs
        ),
        cost_estimate=cost,
    )(x_packed, w_big, b_big)

    out2d = out_packed.reshape(m_pack, out_features)
    if m_pack != M:
        out2d = out2d[:M]                       # drop padded rows
    return out2d.reshape(*orig_shape[:-1], out_features)


if __name__ == "__main__":
    key = jax.random.PRNGKey(0)
    kx, kw, kb = jax.random.split(key, 3)

    # Small shapes consistent with the module: Linear(8, 8) acts on last dim = 8.
    B, H, W, F = 1, 32, 32, 8
    x = jax.random.normal(kx, (B, H, W, F), dtype=jnp.float32)

    # Deterministic parameter init (shapes from nn.Linear(8, 8)).
    bound = 1.0 / jnp.sqrt(jnp.float32(F))
    weight = jax.random.uniform(kw, (8, 8), jnp.float32, -bound, bound)
    bias = jax.random.uniform(kb, (8,), jnp.float32, -bound, bound)

    # Hoisted out of the per-call path: build packed params once.
    w_big, b_big = pack_params(weight, bias)

    out = linear_clamp(x, w_big, b_big)
    out = jax.block_until_ready(out)

    # Reference check in plain JAX.
    ref = jnp.clip(x @ weight.T + bias, -12.0, 12.0)
    assert out.shape == (B, H, W, 8)
    assert jnp.allclose(out, ref, atol=1e-5, rtol=1e-5)

    print("KERNEL_OK")
</pallas_src>

<mosaic_0001>
module attributes {stable_mosaic.version = 11 : i64} {
  func.func @_linear_clamp_kernel(%arg0: i32, %arg1: memref<32x128xf32, #tpu.memory_space<vmem>>, %arg2: memref<128x128xf32, #tpu.memory_space<vmem>>, %arg3: memref<1x128xf32, #tpu.memory_space<vmem>>, %arg4: memref<32x128xf32, #tpu.memory_space<vmem>>) attributes {dimension_semantics = [#tpu.dimension_semantics<parallel>], iteration_bounds = array<i64: 2>, scalar_prefetch = 0 : i64, scratch_operands = 0 : i64, tpu.core_type = #tpu.core_type<tc>, window_params = [{transform_indices = @transform_0, window_bounds = array<i64: 32, 128>}, {pipeline_mode = #tpu.pipeline_mode<synchronous>, transform_indices = @transform_1, window_bounds = array<i64: 128, 128>}, {pipeline_mode = #tpu.pipeline_mode<synchronous>, transform_indices = @transform_2, window_bounds = array<i64: 1, 128>}, {transform_indices = @transform_3, window_bounds = array<i64: 32, 128>}]} {
    %c0 = arith.constant 0 : index
    %c0_0 = arith.constant 0 : index
    %0 = vector.load %arg1[%c0, %c0_0] : memref<32x128xf32, #tpu.memory_space<vmem>>, vector<32x128xf32>
    %c0_1 = arith.constant 0 : index
    %c0_2 = arith.constant 0 : index
    %1 = vector.load %arg2[%c0_1, %c0_2] : memref<128x128xf32, #tpu.memory_space<vmem>>, vector<128x128xf32>
    %cst = arith.constant dense<0.000000e+00> : vector<32x128xf32>
    %2 = tpu.matmul %0, %1, %cst {dimension_numbers = #tpu.dot_dimension_numbers<[1], [0], [0], [1], [0, 0, 1, 1], [], []>, precision = #tpu.contract_precision<fp32>} : vector<32x128xf32>, vector<128x128xf32>, vector<32x128xf32> -> vector<32x128xf32>
    %c0_3 = arith.constant 0 : index
    %c0_4 = arith.constant 0 : index
    %3 = vector.load %arg3[%c0_3, %c0_4] : memref<1x128xf32, #tpu.memory_space<vmem>>, vector<1x128xf32>
    %4 = vector.broadcast %3 : vector<1x128xf32> to vector<32x128xf32>
    %5 = arith.addf %2, %4 : vector<32x128xf32>
    %cst_5 = arith.constant -1.200000e+01 : f32
    %cst_6 = arith.constant 1.200000e+01 : f32
    %6 = vector.broadcast %cst_5 : f32 to vector<32x128xf32>
    %7 = arith.maximumf %6, %5 : vector<32x128xf32>
    %8 = vector.broadcast %cst_6 : f32 to vector<32x128xf32>
    %9 = arith.minimumf %8, %7 : vector<32x128xf32>
    %c0_7 = arith.constant 0 : index
    %c0_8 = arith.constant 0 : index
    %10 = vector.load %arg4[%c0_7, %c0_8] : memref<32x128xf32, #tpu.memory_space<vmem>>, vector<32x128xf32>
    tpu.vector_store %arg4[%c0_7, %c0_8], %9 {strides = array<i32>} : memref<32x128xf32, #tpu.memory_space<vmem>>, vector<32x128xf32>,
    return
  }
  func.func @transform_0(%arg0: i32) -> (i32, i32) {
    %c0_i32 = arith.constant 0 : i32
    %c0_i32_0 = arith.constant 0 : i32
    return %arg0, %c0_i32 : i32, i32
  }
  func.func @transform_1(%arg0: i32) -> (i32, i32) {
    %c0_i32 = arith.constant 0 : i32
    %c0_i32_0 = arith.constant 0 : i32
    %c0_i32_1 = arith.constant 0 : i32
    return %c0_i32, %c0_i32_0 : i32, i32
  }
  func.func @transform_2(%arg0: i32) -> (i32, i32) {
    %c0_i32 = arith.constant 0 : i32
    %c0_i32_0 = arith.constant 0 : i32
    %c0_i32_1 = arith.constant 0 : i32
    return %c0_i32, %c0_i32_0 : i32, i32
  }
  func.func @transform_3(%arg0: i32) -> (i32, i32) {
    %c0_i32 = arith.constant 0 : i32
    %c0_i32_0 = arith.constant 0 : i32
    return %arg0, %c0_i32 : i32, i32
  }
}

</mosaic_0001>

<llo_original>
// kernel: linear_clamp.1
$region0: #{linear_clamp.1}
  #allocation0 [shape = 'u32[]', space=smem, size = 0x4, offset = 0x4, fixed_abs, tag = 'smem constant byte address 0x4 - core index']
  #allocation1 [shape = 'u32[72,128]{1,0:T(1,128)}', space=vmem, size = 0x9000, scoped, tag = 'internal scratch']
  %s0 = inlined_call_operand.vmem [shape: f32[64,128], index: 0, kind: input, shape index: {}]
  %s1 = inlined_call_operand.vmem [shape: f32[128,128], index: 1, kind: input, shape index: {}]
  %s2 = inlined_call_operand.vmem [shape: f32[1,128], index: 2, kind: input, shape index: {}]
  %s3 = inlined_call_operand.vmem [shape: f32[64,128], index: 3, kind: output, shape index: {}]
  %s4 = sld [smem:[#allocation0]]
  $region45: #{linear_clamp.1} parent=0
    _
  %s6 = ssub.s32 1, %s4
  %s7 = scalar_select 0, %s6, %s4
  loop: start=0, step=1, limit=4
  $region2: #{linear_clamp.1} parent=0 // loop_pre_header
    _
  $region3: #{linear_clamp.1} parent=0 // loop_header
    %s9 = sphi 0, %s13
    %p10 = scmp.ge.s32.totalorder %s9, 4
    %s19 = sphi 0, %s21
    %s22 = sphi 0, %s19
    %s23 = sphi 0, %s22
    %s39 = sphi 0, %s23
    %s43 = sphi 0, %s43
    %s45 = sphi 0, %s43
    %s46 = sphi 0, %s45
    %s60 = sphi 0, %s46
    %s64 = sphi 0, %s64
    %s66 = sphi 0, %s64
    %s67 = sphi 0, %s66
    %s81 = sphi 0, %s67
    %s87 = sphi 0, %s89
    %s90 = sphi 0, %s87
    %s91 = sphi 0, %s90
    %s107 = sphi 0, %s91
  $region4: #{linear_clamp.1} parent=0 // loop_header_branch
    %12 = sbr.rel (%p10) target = $region8
  $region5: #{linear_clamp.1} parent=0 // loop_body
    %s14 = ssub.s32 %s9, 1
    %s15 = ssub.s32 %s9, 2
    %s16 = sadd.s32 %s9, 1
    %s17 = ssub.s32 %s9, %s16
    %p18 = scmp.eq.s32.totalorder %s17, 0
    %s20 = sadd.s32 %s19, 1
    %s21 = scalar_select %p18, %s19, %s20
    %p24 = pneg %p18
    %p25 = scmp.eq.s32.totalorder %s9, 1
    %p26 = por %p24, %p25
    %p27 = scmp.ne.s32.totalorder %s19, %s22
    %p28 = scmp.eq.s32.totalorder %s9, 0
    %p29 = por %p27, %p28
    %p30 = scmp.ne.s32.totalorder %s19, %s22
    %p31 = scmp.eq.s32.totalorder %s14, 1
    %p32 = por %p30, %p31
    %p33 = scmp.ne.s32.totalorder %s22, %s23
    %p34 = scmp.eq.s32.totalorder %s14, 0
    %p35 = por %p33, %p34
    %p36 = scmp.ne.s32.totalorder %s22, %s23
    %p37 = scmp.eq.s32.totalorder %s15, 1
    %p38 = por %p36, %p37
    %p40 = scmp.ne.s32.totalorder %s23, %s39
    %p41 = scmp.eq.s32.totalorder %s15, 0
    %p42 = por %p40, %p41
    %s44 = sadd.s32 %s43, 1
    %p47 = scmp.eq.s32.totalorder %s9, 1
    %p48 = scmp.ne.s32.totalorder %s43, %s45
    %p49 = scmp.eq.s32.totalorder %s9, 0
    %p50 = por %p48, %p49
    %p51 = scmp.ne.s32.totalorder %s43, %s45
    %p52 = scmp.eq.s32.totalorder %s14, 1
    %p53 = por %p51, %p52
    %p54 = scmp.ne.s32.totalorder %s45, %s46
    %p55 = scmp.eq.s32.totalorder %s14, 0
    %p56 = por %p54, %p55
    %p57 = scmp.ne.s32.totalorder %s45, %s46
    %p58 = scmp.eq.s32.totalorder %s15, 1
    %p59 = por %p57, %p58
    %p61 = scmp.ne.s32.totalorder %s46, %s60
    %p62 = scmp.eq.s32.totalorder %s15, 0
    %p63 = por %p61, %p62
    %s65 = sadd.s32 %s64, 1
    %p68 = scmp.eq.s32.totalorder %s9, 1
    %p69 = scmp.ne.s32.totalorder %s64, %s66
    %p70 = scmp.eq.s32.totalorder %s9, 0
    %p71 = por %p69, %p70
    %p72 = scmp.ne.s32.totalorder %s64, %s66
    %p73 = scmp.eq.s32.totalorder %s14, 1
    %p74 = por %p72, %p73
    %p75 = scmp.ne.s32.totalorder %s66, %s67
    %p76 = scmp.eq.s32.totalorder %s14, 0
    %p77 = por %p75, %p76
    %p78 = scmp.ne.s32.totalorder %s66, %s67
    %p79 = scmp.eq.s32.totalorder %s15, 1
    %p80 = por %p78, %p79
    %p82 = scmp.ne.s32.totalorder %s67, %s81
    %p83 = scmp.eq.s32.totalorder %s15, 0
    %p84 = por %p82, %p83
    %s85 = ssub.s32 %s9, %s16
    %p86 = scmp.eq.s32.totalorder %s85, 0
    %s88 = sadd.s32 %s87, 1
    %s89 = scalar_select %p86, %s87, %s88
    %p92 = pneg %p86
    %p93 = scmp.eq.s32.totalorder %s9, 1
    %p94 = por %p92, %p93
    %p95 = scmp.ne.s32.totalorder %s87, %s90
    %p96 = scmp.eq.s32.totalorder %s9, 0
    %p97 = por %p95, %p96
    %p98 = scmp.ne.s32.totalorder %s87, %s90
    %p99 = scmp.eq.s32.totalorder %s14, 1
    %p100 = por %p98, %p99
    %p101 = scmp.ne.s32.totalorder %s90, %s91
    %p102 = scmp.eq.s32.totalorder %s14, 0
    %p103 = por %p101, %p102
    %p104 = scmp.ne.s32.totalorder %s90, %s91
    %p105 = scmp.eq.s32.totalorder %s15, 1
    %p106 = por %p104, %p105
    %p108 = scmp.ne.s32.totalorder %s91, %s107
    %p109 = scmp.eq.s32.totalorder %s15, 0
    %p110 = por %p108, %p109
    %p111 = scmp.le.s32.totalorder 1, %s9
    %p112 = scmp.lt.s32.totalorder %s9, 3
    %p113 = pnand %p111, %p112
    %p114 = pneg %p113
    // Predicated region
    $region9: #{linear_clamp.1} parent=5 // pred_check
      _
    $region10: #{linear_clamp.1} parent=5 // pred_check_branch
      %116 = sbr.rel (%p113) target = $region12
    $region11: #{linear_clamp.1} parent=5 // pred_region
      %s117 = ssub.s32 %s9, 1
      // Predicated region
      $region13: #{linear_clamp.1} parent=11 // pred_check
        %p118 = pneg %p56
      $region14: #{linear_clamp.1} parent=11 // pred_check_branch
        %120 = sbr.rel (%p118) target = $region16
      $region15: #{linear_clamp.1} parent=11 // pred_region
        _
      $region16: #{linear_clamp.1} parent=11 // pred_fallthru
        _
      // Predicated region
      $region17: #{linear_clamp.1} parent=11 // pred_check
        %p121 = pneg %p77
      $region18: #{linear_clamp.1} parent=11 // pred_check_branch
        %123 = sbr.rel (%p121) target = $region20
      $region19: #{linear_clamp.1} parent=11 // pred_region
        _
      $region20: #{linear_clamp.1} parent=11 // pred_fallthru
        _
    $region12: #{linear_clamp.1} parent=5 // pred_fallthru
      _
    %p124 = scmp.lt.s32.totalorder %s9, 2
    // Predicated region
    $region21: #{linear_clamp.1} parent=5 // pred_check
      %p125 = pneg %p124
    $region22: #{linear_clamp.1} parent=5 // pred_check_branch
      %127 = sbr.rel (%p125) target = $region24
    $region23: #{linear_clamp.1} parent=5 // pred_region
      // Predicated region
      $region25: #{linear_clamp.1} parent=23 // pred_check
        %p128 = pneg %p29
      $region26: #{linear_clamp.1} parent=23 // pred_check_branch
        %130 = sbr.rel (%p128) target = $region28
      $region27: #{linear_clamp.1} parent=23 // pred_region
        %s131 = smul.u32 4, %s9
        %p132 = scmp.lt.s32.totalorder %s131, 7
        %s133 = scalar_select %p132, %s131, 7
        %s134 = smul.addr %s133, 8
        %s135 = scalar_lea.vmem %s0, %s134
        %s136 = smul.u32 4, %s9
      $region28: #{linear_clamp.1} parent=23 // pred_fallthru
        _
    $region24: #{linear_clamp.1} parent=5 // pred_fallthru
      _
    %p137 = scmp.le.s32.totalorder 1, %s9
    %p138 = scmp.lt.s32.totalorder %s9, 3
    %p139 = pnand %p137, %p138
    %p140 = pneg %p139
    // Predicated region
    $region29: #{linear_clamp.1} parent=5 // pred_check
      _
    $region30: #{linear_clamp.1} parent=5 // pred_check_branch
      %142 = sbr.rel (%p139) target = $region32
    $region31: #{linear_clamp.1} parent=5 // pred_region
      %s143 = ssub.s32 %s9, 1
      %s144 = smul.u32 4, %s14
      %p145 = scmp.lt.s32.totalorder %s144, 7
      %s146 = scalar_select %p145, %s144, 7
      %s147 = smul.addr %s146, 8
      %s148 = scalar_lea.vmem %s0, %s147
      %p149 = pneg %p35
      %p150 = pneg %p32
      %p151 = pneg %p56
      %p152 = pneg %p53
      %p153 = pneg %p77
      %p154 = pneg %p74
      %p155 = pneg %p103
      %p156 = pneg %p100
      %s157 = smul.u32 4, %s14
      %p158 = scmp.lt.s32.totalorder %s157, 7
      %s159 = scalar_select %p158, %s157, 7
      %s160 = smul.addr %s159, 8
      %s161 = scalar_lea.vmem %s3, %s160
      %s162 = smul.u32 4, %s14
      %p163 = scmp.lt.s32.totalorder %s162, 7
      %s164 = scalar_select %p163, %s162, 7
      %s165 = smul.addr %s164, 8
      %s166 = scalar_lea.vmem %s0, %s165
      %s167 = smul.u32 4, %s14
      %s168 = smul.u32 4, %s14
      %p169 = scmp.lt.s32.totalorder %s168, 7
      %s170 = scalar_select %p169, %s168, 7
      %s171 = smul.addr %s170, 8
      %s172 = scalar_lea.vmem %s3, %s171
      %s173 = smul.u32 4, %s14
      %v174 = vld [vmem:[%s166] sm:$0xff]
      %v175 = vld [vmem:[%s166 + $0x8] sm:$0xff]
      %v176 = vld [vmem:[%s166 + $0x10] sm:$0xff]
      %v177 = vld [vmem:[%s166 + $0x18] sm:$0xff]
      %v178 = vld [vmem:[%s1] sm:$0xff]
      %v179 = vld [vmem:[%s1 + $0x8] sm:$0xff]
      %v180 = vld [vmem:[%s1 + $0x10] sm:$0xff]
      %v181 = vld [vmem:[%s1 + $0x18] sm:$0xff]
      %v182 = vld [vmem:[%s1 + $0x20] sm:$0xff]
      %v183 = vld [vmem:[%s1 + $0x28] sm:$0xff]
      %v184 = vld [vmem:[%s1 + $0x30] sm:$0xff]
      %v185 = vld [vmem:[%s1 + $0x38] sm:$0xff]
      %v186 = vld [vmem:[%s1 + $0x40] sm:$0xff]
      %v187 = vld [vmem:[%s1 + $0x48] sm:$0xff]
      %v188 = vld [vmem:[%s1 + $0x50] sm:$0xff]
      %v189 = vld [vmem:[%s1 + $0x58] sm:$0xff]
      %v190 = vld [vmem:[%s1 + $0x60] sm:$0xff]
      %v191 = vld [vmem:[%s1 + $0x68] sm:$0xff]
      %v192 = vld [vmem:[%s1 + $0x70] sm:$0xff]
      %v193 = vld [vmem:[%s1 + $0x78] sm:$0xff]
      %v194 = vld [vmem:[%s2] sm:$0x1]
      %v196 = vperm.slane %v194, 0
      %v198 = vand.u32 %v193, 4294901760
      %199 = vmatpush.msra.mxu0 %v198
      %v200 = vand.u32 %v192, 4294901760
      %201 = vmatpush.msra.mxu0 %v200
      %v202 = vand.u32 %v191, 4294901760
      %203 = vmatpush.msra.mxu0 %v202
      %v204 = vand.u32 %v190, 4294901760
      %205 = vmatpush.msra.mxu0 %v204
      %v206 = vand.u32 %v189, 4294901760
      %207 = vmatpush.msra.mxu0 %v206
      %v208 = vand.u32 %v188, 4294901760
      %209 = vmatpush.msra.mxu0 %v208
      %v210 = vand.u32 %v187, 4294901760
      %211 = vmatpush.msra.mxu0 %v210
      %v212 = vand.u32 %v186, 4294901760
      %213 = vmatpush.msra.mxu0 %v212
      %v214 = vand.u32 %v185, 4294901760
      %215 = vmatpush.msra.mxu0 %v214
      %v216 = vand.u32 %v184, 4294901760
      %217 = vmatpush.msra.mxu0 %v216
      %v218 = vand.u32 %v183, 4294901760
      %219 = vmatpush.msra.mxu0 %v218
      %v220 = vand.u32 %v182, 4294901760
      %221 = vmatpush.msra.mxu0 %v220
      %v222 = vand.u32 %v181, 4294901760
      %223 = vmatpush.msra.mxu0 %v222
      %v224 = vand.u32 %v180, 4294901760
      %225 = vmatpush.msra.mxu0 %v224
      %v226 = vand.u32 %v179, 4294901760
      %227 = vmatpush.msra.mxu0 %v226
      %v228 = vand.u32 %v178, 4294901760
      %229 = vmatpush.msra.mxu0 %v228
      %v230 = vand.u32 %v174, 4294901760
      %v231 = vsub.f32 %v174, %v230
      %v232 = vand.u32 %v231, 4294901760
      %v233 = vsub.f32 %v231, %v232
      %v234 = vand.u32 %v233, 4294901760
      %235 = vmatmul.f32.gmra.mxu0 %v234
      %v236 = vpop.f32.mrf.mxu0
      %v237 = vadd.f32 %v196, %v236
      %v238 = vand.u32 %v175, 4294901760
      %v239 = vsub.f32 %v175, %v238
      %v240 = vand.u32 %v239, 4294901760
      %v241 = vsub.f32 %v239, %v240
      %v242 = vand.u32 %v241, 4294901760
      %243 = vmatmul.f32.gmra.mxu0 %v242
      %v244 = vpop.f32.mrf.mxu0
      %v245 = vadd.f32 %v196, %v244
      %v246 = vand.u32 %v176, 4294901760
      %v247 = vsub.f32 %v176, %v246
      %v248 = vand.u32 %v247, 4294901760
      %v249 = vsub.f32 %v247, %v248
      %v250 = vand.u32 %v249, 4294901760
      %251 = vmatmul.f32.gmra.mxu0 %v250
      %v252 = vpop.f32.mrf.mxu0
      %v253 = vadd.f32 %v196, %v252
      %v254 = vand.u32 %v177, 4294901760
      %v255 = vsub.f32 %v177, %v254
      %v256 = vand.u32 %v255, 4294901760
      %v257 = vsub.f32 %v255, %v256
      %v258 = vand.u32 %v257, 4294901760
      %259 = vmatmul.f32.gmra.mxu0 %v258
      %v260 = vpop.f32.mrf.mxu0
      %v261 = vadd.f32 %v196, %v260
      %262 = vdwg.mxu0
      %v263 = vand.u32 %v193, 4294901760
      %v264 = vsub.f32 %v193, %v263
      %v265 = vand.u32 %v264, 4294901760
      %v266 = vsub.f32 %v264, %v265
      %v267 = vand.u32 %v266, 4294901760
      %268 = vmatpush.msra.mxu0 %v267
      %v269 = vand.u32 %v192, 4294901760
      %v270 = vsub.f32 %v192, %v269
      %v271 = vand.u32 %v270, 4294901760
      %v272 = vsub.f32 %v270, %v271
      %v273 = vand.u32 %v272, 4294901760
      %274 = vmatpush.msra.mxu0 %v273
      %v275 = vand.u32 %v191, 4294901760
      %v276 = vsub.f32 %v191, %v275
      %v277 = vand.u32 %v276, 4294901760
      %v278 = vsub.f32 %v276, %v277
      %v279 = vand.u32 %v278, 4294901760
      %280 = vmatpush.msra.mxu0 %v279
      %v281 = vand.u32 %v190, 4294901760
      %v282 = vsub.f32 %v190, %v281
      %v283 = vand.u32 %v282, 4294901760
      %v284 = vsub.f32 %v282, %v283
      %v285 = vand.u32 %v284, 4294901760
      %286 = vmatpush.msra.mxu0 %v285
      %v287 = vand.u32 %v189, 4294901760
      %v288 = vsub.f32 %v189, %v287
      %v289 = vand.u32 %v288, 4294901760
      %v290 = vsub.f32 %v288, %v289
      %v291 = vand.u32 %v290, 4294901760
      %292 = vmatpush.msra.mxu0 %v291
      %v293 = vand.u32 %v188, 4294901760
      %v294 = vsub.f32 %v188, %v293
      %v295 = vand.u32 %v294, 4294901760
      %v296 = vsub.f32 %v294, %v295
      %v297 = vand.u32 %v296, 4294901760
      %298 = vmatpush.msra.mxu0 %v297
      %v299 = vand.u32 %v187, 4294901760
      %v300 = vsub.f32 %v187, %v299
      %v301 = vand.u32 %v300, 4294901760
      %v302 = vsub.f32 %v300, %v301
      %v303 = vand.u32 %v302, 4294901760
      %304 = vmatpush.msra.mxu0 %v303
      %v305 = vand.u32 %v186, 4294901760
      %v306 = vsub.f32 %v186, %v305
      %v307 = vand.u32 %v306, 4294901760
      %v308 = vsub.f32 %v306, %v307
      %v309 = vand.u32 %v308, 4294901760
      %310 = vmatpush.msra.mxu0 %v309
      %v311 = vand.u32 %v185, 4294901760
      %v312 = vsub.f32 %v185, %v311
      %v313 = vand.u32 %v312, 4294901760
      %v314 = vsub.f32 %v312, %v313
      %v315 = vand.u32 %v314, 4294901760
      %316 = vmatpush.msra.mxu0 %v315
      %v317 = vand.u32 %v184, 4294901760
      %v318 = vsub.f32 %v184, %v317
      %v319 = vand.u32 %v318, 4294901760
      %v320 = vsub.f32 %v318, %v319
      %v321 = vand.u32 %v320, 4294901760
      %322 = vmatpush.msra.mxu0 %v321
      %v323 = vand.u32 %v183, 4294901760
      %v324 = vsub.f32 %v183, %v323
      %v325 = vand.u32 %v324, 4294901760
      %v326 = vsub.f32 %v324, %v325
      %v327 = vand.u32 %v326, 4294901760
      %328 = vmatpush.msra.mxu0 %v327
      %v329 = vand.u32 %v182, 4294901760
      %v330 = vsub.f32 %v182, %v329
      %v331 = vand.u32 %v330, 4294901760
      %v332 = vsub.f32 %v330, %v331
      %v333 = vand.u32 %v332, 4294901760
      %334 = vmatpush.msra.mxu0 %v333
      %v335 = vand.u32 %v181, 4294901760
      %v336 = vsub.f32 %v181, %v335
      %v337 = vand.u32 %v336, 4294901760
      %v338 = vsub.f32 %v336, %v337
      %v339 = vand.u32 %v338, 4294901760
      %340 = vmatpush.msra.mxu0 %v339
      %v341 = vand.u32 %v180, 4294901760
      %v342 = vsub.f32 %v180, %v341
      %v343 = vand.u32 %v342, 4294901760
      %v344 = vsub.f32 %v342, %v343
      %v345 = vand.u32 %v344, 4294901760
      %346 = vmatpush.msra.mxu0 %v345
      %v347 = vand.u32 %v179, 4294901760
      %v348 = vsub.f32 %v179, %v347
      %v349 = vand.u32 %v348, 4294901760
      %v350 = vsub.f32 %v348, %v349
      %v351 = vand.u32 %v350, 4294901760
      %352 = vmatpush.msra.mxu0 %v351
      %v353 = vand.u32 %v178, 4294901760
      %v354 = vsub.f32 %v178, %v353
      %v355 = vand.u32 %v354, 4294901760
      %v356 = vsub.f32 %v354, %v355
      %v357 = vand.u32 %v356, 4294901760
      %358 = vmatpush.msra.mxu0 %v357
      %v359 = vand.u32 %v174, 4294901760
      %360 = vmatmul.f32.gmra.mxu0 %v359
      %v361 = vpop.f32.mrf.mxu0
      %v362 = vadd.f32 %v237, %v361
      %v363 = vand.u32 %v175, 4294901760
      %364 = vmatmul.f32.gmra.mxu0 %v363
      %v365 = vpop.f32.mrf.mxu0
      %v366 = vadd.f32 %v245, %v365
      %v367 = vand.u32 %v176, 4294901760
      %368 = vmatmul.f32.gmra.mxu0 %v367
      %v369 = vpop.f32.mrf.mxu0
      %v370 = vadd.f32 %v253, %v369
      %v371 = vand.u32 %v177, 4294901760
      %372 = vmatmul.f32.gmra.mxu0 %v371
      %v373 = vpop.f32.mrf.mxu0
      %v374 = vadd.f32 %v261, %v373
      %375 = vdwg.mxu0
      %v376 = vand.u32 %v193, 4294901760
      %v377 = vsub.f32 %v193, %v376
      %378 = vmatpush.msra.mxu0 %v377
      %v379 = vand.u32 %v192, 4294901760
      %v380 = vsub.f32 %v192, %v379
      %381 = vmatpush.msra.mxu0 %v380
      %v382 = vand.u32 %v191, 4294901760
      %v383 = vsub.f32 %v191, %v382
      %384 = vmatpush.msra.mxu0 %v383
      %v385 = vand.u32 %v190, 4294901760
      %v386 = vsub.f32 %v190, %v385
      %387 = vmatpush.msra.mxu0 %v386
      %v388 = vand.u32 %v189, 4294901760
      %v389 = vsub.f32 %v189, %v388
      %390 = vmatpush.msra.mxu0 %v389
      %v391 = vand.u32 %v188, 4294901760
      %v392 = vsub.f32 %v188, %v391
      %393 = vmatpush.msra.mxu0 %v392
      %v394 = vand.u32 %v187, 4294901760
      %v395 = vsub.f32 %v187, %v394
      %396 = vmatpush.msra.mxu0 %v395
      %v397 = vand.u32 %v186, 4294901760
      %v398 = vsub.f32 %v186, %v397
      %399 = vmatpush.msra.mxu0 %v398
      %v400 = vand.u32 %v185, 4294901760
      %v401 = vsub.f32 %v185, %v400
      %402 = vmatpush.msra.mxu0 %v401
      %v403 = vand.u32 %v184, 4294901760
      %v404 = vsub.f32 %v184, %v403
      %405 = vmatpush.msra.mxu0 %v404
      %v406 = vand.u32 %v183, 4294901760
      %v407 = vsub.f32 %v183, %v406
      %408 = vmatpush.msra.mxu0 %v407
      %v409 = vand.u32 %v182, 4294901760
      %v410 = vsub.f32 %v182, %v409
      %411 = vmatpush.msra.mxu0 %v410
      %v412 = vand.u32 %v181, 4294901760
      %v413 = vsub.f32 %v181, %v412
      %414 = vmatpush.msra.mxu0 %v413
      %v415 = vand.u32 %v180, 4294901760
      %v416 = vsub.f32 %v180, %v415
      %417 = vmatpush.msra.mxu0 %v416
      %v418 = vand.u32 %v179, 4294901760
      %v419 = vsub.f32 %v179, %v418
      %420 = vmatpush.msra.mxu0 %v419
      %v421 = vand.u32 %v178, 4294901760
      %v422 = vsub.f32 %v178, %v421
      %423 = vmatpush.msra.mxu0 %v422
      %v424 = vand.u32 %v174, 4294901760
      %v425 = vsub.f32 %v174, %v424
      %426 = vmatmul.f32.gmra.mxu0 %v425
      %v427 = vpop.f32.mrf.mxu0
      %v428 = vadd.f32 %v362, %v427
      %v429 = vand.u32 %v175, 4294901760
      %v430 = vsub.f32 %v175, %v429
      %431 = vmatmul.f32.gmra.mxu0 %v430
      %v432 = vpop.f32.mrf.mxu0
      %v433 = vadd.f32 %v366, %v432
      %v434 = vand.u32 %v176, 4294901760
      %v435 = vsub.f32 %v176, %v434
      %436 = vmatmul.f32.gmra.mxu0 %v435
      %v437 = vpop.f32.mrf.mxu0
      %v438 = vadd.f32 %v370, %v437
      %v439 = vand.u32 %v177, 4294901760
      %v440 = vsub.f32 %v177, %v439
      %441 = vmatmul.f32.gmra.mxu0 %v440
      %v442 = vpop.f32.mrf.mxu0
      %v443 = vadd.f32 %v374, %v442
      %444 = vdwg.mxu0
      %v445 = vand.u32 %v193, 4294901760
      %446 = vmatpush.msra.mxu0 %v445
      %v447 = vand.u32 %v192, 4294901760
      %448 = vmatpush.msra.mxu0 %v447
      %v449 = vand.u32 %v191, 4294901760
      %450 = vmatpush.msra.mxu0 %v449
      %v451 = vand.u32 %v190, 4294901760
      %452 = vmatpush.msra.mxu0 %v451
      %v453 = vand.u32 %v189, 4294901760
      %454 = vmatpush.msra.mxu0 %v453
      %v455 = vand.u32 %v188, 4294901760
      %456 = vmatpush.msra.mxu0 %v455
      %v457 = vand.u32 %v187, 4294901760
      %458 = vmatpush.msra.mxu0 %v457
      %v459 = vand.u32 %v186, 4294901760
      %460 = vmatpush.msra.mxu0 %v459
      %v461 = vand.u32 %v185, 4294901760
      %462 = vmatpush.msra.mxu0 %v461
      %v463 = vand.u32 %v184, 4294901760
      %464 = vmatpush.msra.mxu0 %v463
      %v465 = vand.u32 %v183, 4294901760
      %466 = vmatpush.msra.mxu0 %v465
      %v467 = vand.u32 %v182, 4294901760
      %468 = vmatpush.msra.mxu0 %v467
      %v469 = vand.u32 %v181, 4294901760
      %470 = vmatpush.msra.mxu0 %v469
      %v471 = vand.u32 %v180, 4294901760
      %472 = vmatpush.msra.mxu0 %v471
      %v473 = vand.u32 %v179, 4294901760
      %474 = vmatpush.msra.mxu0 %v473
      %v475 = vand.u32 %v178, 4294901760
      %476 = vmatpush.msra.mxu0 %v475
      %v477 = vand.u32 %v174, 4294901760
      %v478 = vsub.f32 %v174, %v477
      %v479 = vand.u32 %v478, 4294901760
      %480 = vmatmul.f32.gmra.mxu0 %v479
      %v481 = vpop.f32.mrf.mxu0
      %v482 = vadd.f32 %v428, %v481
      %v483 = vand.u32 %v175, 4294901760
      %v484 = vsub.f32 %v175, %v483
      %v485 = vand.u32 %v484, 4294901760
      %486 = vmatmul.f32.gmra.mxu0 %v485
      %v487 = vpop.f32.mrf.mxu0
      %v488 = vadd.f32 %v433, %v487
      %v489 = vand.u32 %v176, 4294901760
      %v490 = vsub.f32 %v176, %v489
      %v491 = vand.u32 %v490, 4294901760
      %492 = vmatmul.f32.gmra.mxu0 %v491
      %v493 = vpop.f32.mrf.mxu0
      %v494 = vadd.f32 %v438, %v493
      %v495 = vand.u32 %v177, 4294901760
      %v496 = vsub.f32 %v177, %v495
      %v497 = vand.u32 %v496, 4294901760
      %498 = vmatmul.f32.gmra.mxu0 %v497
      %v499 = vpop.f32.mrf.mxu0
      %v500 = vadd.f32 %v443, %v499
      %501 = vdwg.mxu0
      %v502 = vand.u32 %v193, 4294901760
      %v503 = vsub.f32 %v193, %v502
      %v504 = vand.u32 %v503, 4294901760
      %505 = vmatpush.msra.mxu0 %v504
      %v506 = vand.u32 %v192, 4294901760
      %v507 = vsub.f32 %v192, %v506
      %v508 = vand.u32 %v507, 4294901760
      %509 = vmatpush.msra.mxu0 %v508
      %v510 = vand.u32 %v191, 4294901760
      %v511 = vsub.f32 %v191, %v510
      %v512 = vand.u32 %v511, 4294901760
      %513 = vmatpush.msra.mxu0 %v512
      %v514 = vand.u32 %v190, 4294901760
      %v515 = vsub.f32 %v190, %v514
      %v516 = vand.u32 %v515, 4294901760
      %517 = vmatpush.msra.mxu0 %v516
      %v518 = vand.u32 %v189, 4294901760
      %v519 = vsub.f32 %v189, %v518
      %v520 = vand.u32 %v519, 4294901760
      %521 = vmatpush.msra.mxu0 %v520
      %v522 = vand.u32 %v188, 4294901760
      %v523 = vsub.f32 %v188, %v522
      %v524 = vand.u32 %v523, 4294901760
      %525 = vmatpush.msra.mxu0 %v524
      %v526 = vand.u32 %v187, 4294901760
      %v527 = vsub.f32 %v187, %v526
      %v528 = vand.u32 %v527, 4294901760
      %529 = vmatpush.msra.mxu0 %v528
      %v530 = vand.u32 %v186, 4294901760
      %v531 = vsub.f32 %v186, %v530
      %v532 = vand.u32 %v531, 4294901760
      %533 = vmatpush.msra.mxu0 %v532
      %v534 = vand.u32 %v185, 4294901760
      %v535 = vsub.f32 %v185, %v534
      %v536 = vand.u32 %v535, 4294901760
      %537 = vmatpush.msra.mxu0 %v536
      %v538 = vand.u32 %v184, 4294901760
      %v539 = vsub.f32 %v184, %v538
      %v540 = vand.u32 %v539, 4294901760
      %541 = vmatpush.msra.mxu0 %v540
      %v542 = vand.u32 %v183, 4294901760
      %v543 = vsub.f32 %v183, %v542
      %v544 = vand.u32 %v543, 4294901760
      %545 = vmatpush.msra.mxu0 %v544
      %v546 = vand.u32 %v182, 4294901760
      %v547 = vsub.f32 %v182, %v546
      %v548 = vand.u32 %v547, 4294901760
      %549 = vmatpush.msra.mxu0 %v548
      %v550 = vand.u32 %v181, 4294901760
      %v551 = vsub.f32 %v181, %v550
      %v552 = vand.u32 %v551, 4294901760
      %553 = vmatpush.msra.mxu0 %v552
      %v554 = vand.u32 %v180, 4294901760
      %v555 = vsub.f32 %v180, %v554
      %v556 = vand.u32 %v555, 4294901760
      %557 = vmatpush.msra.mxu0 %v556
      %v558 = vand.u32 %v179, 4294901760
      %v559 = vsub.f32 %v179, %v558
      %v560 = vand.u32 %v559, 4294901760
      %561 = vmatpush.msra.mxu0 %v560
      %v562 = vand.u32 %v178, 4294901760
      %v563 = vsub.f32 %v178, %v562
      %v564 = vand.u32 %v563, 4294901760
      %565 = vmatpush.msra.mxu0 %v564
      %v566 = vand.u32 %v174, 4294901760
      %567 = vmatmul.f32.gmra.mxu0 %v566
      %v568 = vpop.f32.mrf.mxu0
      %v569 = vadd.f32 %v482, %v568
      %v570 = vand.u32 %v175, 4294901760
      %571 = vmatmul.f32.gmra.mxu0 %v570
      %v572 = vpop.f32.mrf.mxu0
      %v573 = vadd.f32 %v488, %v572
      %v574 = vand.u32 %v176, 4294901760
      %575 = vmatmul.f32.gmra.mxu0 %v574
      %v576 = vpop.f32.mrf.mxu0
      %v577 = vadd.f32 %v494, %v576
      %v578 = vand.u32 %v177, 4294901760
      %579 = vmatmul.f32.gmra.mxu0 %v578
      %v580 = vpop.f32.mrf.mxu0
      %v581 = vadd.f32 %v500, %v580
      %582 = vdwg.mxu0
      %v583 = vand.u32 %v193, 4294901760
      %584 = vmatpush.msra.mxu0 %v583
      %v585 = vand.u32 %v192, 4294901760
      %586 = vmatpush.msra.mxu0 %v585
      %v587 = vand.u32 %v191, 4294901760
      %588 = vmatpush.msra.mxu0 %v587
      %v589 = vand.u32 %v190, 4294901760
      %590 = vmatpush.msra.mxu0 %v589
      %v591 = vand.u32 %v189, 4294901760
      %592 = vmatpush.msra.mxu0 %v591
      %v593 = vand.u32 %v188, 4294901760
      %594 = vmatpush.msra.mxu0 %v593
      %v595 = vand.u32 %v187, 4294901760
      %596 = vmatpush.msra.mxu0 %v595
      %v597 = vand.u32 %v186, 4294901760
      %598 = vmatpush.msra.mxu0 %v597
      %v599 = vand.u32 %v185, 4294901760
      %600 = vmatpush.msra.mxu0 %v599
      %v601 = vand.u32 %v184, 4294901760
      %602 = vmatpush.msra.mxu0 %v601
      %v603 = vand.u32 %v183, 4294901760
      %604 = vmatpush.msra.mxu0 %v603
      %v605 = vand.u32 %v182, 4294901760
      %606 = vmatpush.msra.mxu0 %v605
      %v607 = vand.u32 %v181, 4294901760
      %608 = vmatpush.msra.mxu0 %v607
      %v609 = vand.u32 %v180, 4294901760
      %610 = vmatpush.msra.mxu0 %v609
      %v611 = vand.u32 %v179, 4294901760
      %612 = vmatpush.msra.mxu0 %v611
      %v613 = vand.u32 %v178, 4294901760
      %614 = vmatpush.msra.mxu0 %v613
      %v615 = vand.u32 %v174, 4294901760
      %616 = vmatmul.f32.gmra.mxu0 %v615
      %v617 = vpop.f32.mrf.mxu0
      %v618 = vadd.f32 %v569, %v617
      %v619 = vand.u32 %v175, 4294901760
      %620 = vmatmul.f32.gmra.mxu0 %v619
      %v621 = vpop.f32.mrf.mxu0
      %v622 = vadd.f32 %v573, %v621
      %v623 = vand.u32 %v176, 4294901760
      %624 = vmatmul.f32.gmra.mxu0 %v623
      %v625 = vpop.f32.mrf.mxu0
      %v626 = vadd.f32 %v577, %v625
      %v627 = vand.u32 %v177, 4294901760
      %628 = vmatmul.f32.gmra.mxu0 %v627
      %v629 = vpop.f32.mrf.mxu0
      %v630 = vadd.f32 %v581, %v629
      %631 = vdwg.mxu0
      %v632 = vmax.f32 %v618, -12.0
      %v633 = vmax.f32 %v622, -12.0
      %v634 = vmax.f32 %v626, -12.0
      %v635 = vmax.f32 %v630, -12.0
      %v636 = vmin.f32 %v632, 12.0
      %v637 = vmin.f32 %v633, 12.0
      %v638 = vmin.f32 %v634, 12.0
      %v639 = vmin.f32 %v635, 12.0
      %640 = vst [vmem:[%s172] sm:$0xff] %v636
      %641 = vst [vmem:[%s172 + $0x8] sm:$0xff] %v637
      %642 = vst [vmem:[%s172 + $0x10] sm:$0xff] %v638
      %643 = vst [vmem:[%s172 + $0x18] sm:$0xff] %v639
      %s644 = smul.u32 4, %s14
      %p645 = scmp.lt.s32.totalorder %s644, 7
      %s646 = scalar_select %p645, %s644, 7
      %s647 = smul.addr %s646, 8
      %s648 = scalar_lea.vmem %s3, %s647
      // Predicated region
      $region33: #{linear_clamp.1} parent=31 // pred_check
        %p649 = pneg %p100
      $region34: #{linear_clamp.1} parent=31 // pred_check_branch
        %651 = sbr.rel (%p649) target = $region36
      $region35: #{linear_clamp.1} parent=31 // pred_region
        %s652 = smul.u32 4, %s14
      $region36: #{linear_clamp.1} parent=31 // pred_fallthru
        _
    $region32: #{linear_clamp.1} parent=5 // pred_fallthru
      _
    %p653 = scmp.le.s32.totalorder 2, %s9
    // Predicated region
    $region37: #{linear_clamp.1} parent=5 // pred_check
      %p654 = pneg %p653
    $region38: #{linear_clamp.1} parent=5 // pred_check_branch
      %656 = sbr.rel (%p654) target = $region40
    $region39: #{linear_clamp.1} parent=5 // pred_region
      %s657 = ssub.s32 %s9, 2
      // Predicated region
      $region41: #{linear_clamp.1} parent=39 // pred_check
        %p658 = pneg %p106
      $region42: #{linear_clamp.1} parent=39 // pred_check_branch
        %660 = sbr.rel (%p658) target = $region44
      $region43: #{linear_clamp.1} parent=39 // pred_region
        %s661 = smul.u32 4, %s15
        %p662 = scmp.lt.s32.totalorder %s661, 7
        %s663 = scalar_select %p662, %s661, 7
        %s664 = smul.addr %s663, 8
        %s665 = scalar_lea.vmem %s3, %s664
      $region44: #{linear_clamp.1} parent=39 // pred_fallthru
        _
    $region40: #{linear_clamp.1} parent=5 // pred_fallthru
      _
  $region6: #{linear_clamp.1} parent=0 // loop_footer
    %s13 = sadd.s32 1, %s9
  $region7: #{linear_clamp.1} parent=0 // loop_footer_branch
    %8 = sbr.rel target = $region3
  $region8: #{linear_clamp.1} parent=0 // loop_exit
    _

</llo_original>
